<compile_context>
chip_gen: v5e
topology: v5e:2x2
jax: 0.10.0
libtpu: 0.0.40
codegen_flags: <defaults>
</compile_context>

<pallas_src>
import jax
import jax.numpy as jnp
from jax.experimental import pallas as pl
from jax.experimental.pallas import tpu as pltpu


def one_hot_kernel(idx_ref, out_ref):
    # idx_ref: (tn, 1) int32, out_ref: (tn, td) float32
    td = out_ref.shape[-1]
    col0 = pl.program_id(1) * td                                   # global column offset
    lane_ids = col0 + jax.lax.broadcasted_iota(jnp.int32, out_ref.shape, 1)
    out_ref[...] = (lane_ids == idx_ref[...]).astype(out_ref.dtype)


def _pick_td(depth):
    """Depth (lane) tile: multiple of 128 when possible, else full depth."""
    if depth < 128:
        return depth                     # masked stores unavoidable; compensate with big tn
    for cand in (2048, 1024, 512, 256, 128):
        if depth % cand == 0:
            return cand
    return depth                         # depth not a multiple of 128: keep full width


def _pick_tn(n, td):
    """Row (sublane) tile: ~2 MiB of f32 output per block, capped at 1024 rows."""
    target_bytes = 2 * 1024 * 1024
    tn = target_bytes // (td * 4)
    tn = max(8, min(tn, 1024))
    # Don't tile wider than the (8-padded) number of rows we actually have.
    tn = min(tn, ((n + 7) // 8) * 8)
    tn = max(8, (tn // 8) * 8)
    return tn


def one_hot(x_in, depth, *, out_dtype=jnp.float32, tn=None, td=None):
    """Pallas equivalent of One_Hot(depth).forward(x_in).

    x_in: 1-D integer array of shape (N,). Returns (N, depth) float32
    (matching torch.eye(depth).index_select(0, x)).
    """
    n = int(x_in.shape[0])
    if td is None:
        td = _pick_td(depth)
    assert depth % td == 0, "depth tile must divide depth"
    if tn is None:
        tn = _pick_tn(n, td)
    assert tn % 8 == 0, "row tile must be a multiple of 8"

    # Pad rows to a multiple of tn (padded rows use index 0 and are sliced off).
    n_pad = pl.cdiv(n, tn) * tn
    idx = x_in.astype(jnp.int32).reshape(n, 1)
    if n_pad != n:
        idx = jnp.pad(idx, ((0, n_pad - n), (0, 0)))

    grid = (n_pad // tn, depth // td)

    out = pl.pallas_call(
        one_hot_kernel,
        out_shape=jax.ShapeDtypeStruct((n_pad, depth), out_dtype),
        grid=grid,
        in_specs=[
            # Index block is re-used across the whole depth axis (j ignored).
            pl.BlockSpec((tn, 1), lambda i, j: (i, 0)),
        ],
        out_specs=pl.BlockSpec((tn, td), lambda i, j: (i, j)),
        compiler_params=pltpu.CompilerParams(
            dimension_semantics=("parallel", "parallel"),
        ),
    )(idx)

    if n_pad != n:
        out = out[:n]
    return out
    # TODO(synk): out-of-range / negative indices yield an all-zero row here,
    # whereas torch.eye(depth).index_select(0, x) would raise.


if __name__ == "__main__":
    key = jax.random.PRNGKey(0)

    # Small test matching the module's semantics: depth=16, N=32.
    depth = 16
    n = 32
    x_in = jax.random.randint(key, (n,), minval=0, maxval=depth, dtype=jnp.int32)

    out = one_hot(x_in, depth)
    out = jax.block_until_ready(out)

    ref = jnp.eye(depth, dtype=jnp.float32)[x_in]
    assert out.shape == (n, depth)
    assert out.dtype == jnp.float32
    assert bool(jnp.all(out == ref))

    # Second check exercising the depth-tiled path and row padding (N not a
    # multiple of the chosen tile): depth=256 (lane-dense td), N=40.
    depth2 = 256
    n2 = 40
    key2 = jax.random.PRNGKey(1)
    x_in2 = jax.random.randint(key2, (n2,), minval=0, maxval=depth2, dtype=jnp.int32)

    out2 = jax.block_until_ready(one_hot(x_in2, depth2))
    ref2 = jnp.eye(depth2, dtype=jnp.float32)[x_in2]
    assert out2.shape == (n2, depth2)
    assert bool(jnp.all(out2 == ref2))

    print("KERNEL_OK")
</pallas_src>

<mosaic_0001>
module attributes {stable_mosaic.version = 11 : i64} {
  func.func @one_hot_kernel(%arg0: i32, %arg1: i32, %arg2: memref<32x1xi32, #tpu.memory_space<vmem>>, %arg3: memref<32x16xf32, #tpu.memory_space<vmem>>) attributes {dimension_semantics = [#tpu.dimension_semantics<parallel>, #tpu.dimension_semantics<parallel>], iteration_bounds = array<i64: 1, 1>, scalar_prefetch = 0 : i64, scratch_operands = 0 : i64, tpu.core_type = #tpu.core_type<tc>, window_params = [{transform_indices = @transform_0, window_bounds = array<i64: 32, 1>}, {transform_indices = @transform_1, window_bounds = array<i64: 32, 16>}]} {
    %c16_i32 = arith.constant 16 : i32
    %0 = arith.muli %arg1, %c16_i32 : i32
    %1 = tpu.iota {dimensions = array<i32: 1>} : vector<32x16xi32>
    %2 = vector.broadcast %0 : i32 to vector<32x16xi32>
    %3 = arith.addi %2, %1 : vector<32x16xi32>
    %c0 = arith.constant 0 : index
    %c0_0 = arith.constant 0 : index
    %4 = vector.load %arg2[%c0, %c0_0] : memref<32x1xi32, #tpu.memory_space<vmem>>, vector<32x1xi32>
    %5 = vector.broadcast %4 : vector<32x1xi32> to vector<32x16xi32>
    %6 = arith.cmpi eq, %3, %5 : vector<32x16xi32>
    %7 = arith.extui %6 : vector<32x16xi1> to vector<32x16xi32>
    %8 = arith.sitofp %7 : vector<32x16xi32> to vector<32x16xf32>
    %c0_1 = arith.constant 0 : index
    %c0_2 = arith.constant 0 : index
    %9 = vector.load %arg3[%c0_1, %c0_2] : memref<32x16xf32, #tpu.memory_space<vmem>>, vector<32x16xf32>
    tpu.vector_store %arg3[%c0_1, %c0_2], %8 {strides = array<i32>} : memref<32x16xf32, #tpu.memory_space<vmem>>, vector<32x16xf32>,
    return
  }
  func.func @transform_0(%arg0: i32, %arg1: i32) -> (i32, i32) {
    %c0_i32 = arith.constant 0 : i32
    %c0_i32_0 = arith.constant 0 : i32
    return %arg0, %c0_i32 : i32, i32
  }
  func.func @transform_1(%arg0: i32, %arg1: i32) -> (i32, i32) {
    %c0_i32 = arith.constant 0 : i32
    return %arg0, %arg1 : i32, i32
  }
}

</mosaic_0001>

<llo_original>
// kernel: tpu_custom_call.1
$region0: #{tpu_custom_call.1}
  #allocation0 [shape = 'u32[]', space=smem, size = 0x4, offset = 0x4, fixed_abs, tag = 'smem constant byte address 0x4 - core index']
  #allocation1 [shape = 'u32[72,128]{1,0:T(1,128)}', space=vmem, size = 0x9000, scoped, tag = 'internal scratch']
  %s0 = inlined_call_operand.vmem [shape: s32[32,1], index: 0, kind: input, shape index: {}]
  %s1 = inlined_call_operand.vmem [shape: f32[32,16], index: 1, kind: output, shape index: {}]
  %s2 = sld [smem:[#allocation0]]
  $region14: #{tpu_custom_call.1} parent=0
    _
  %s4 = ssub.s32 1, %s2
  %s5 = scalar_select 0, %s4, %s2
  // Predicated region
  $region2: #{tpu_custom_call.1} parent=0 // pred_check
    _
  $region3: #{tpu_custom_call.1} parent=0 // pred_check_branch
    %7 = sbr.rel (0) target = $region5
  $region4: #{tpu_custom_call.1} parent=0 // pred_region
    _
  $region5: #{tpu_custom_call.1} parent=0 // pred_fallthru
    _
  %s8 = smul.u32 0, 16
  %v9 = vlaneseq
  %v10 = vand.u32 %v9, 127
  %v11 = vstv %s8
  %v12 = vadd.s32 %v11, %v10
  %v13 = vld [vmem:[%s0] sm:$0xff]
  %v14 = vld [vmem:[%s0 + $0x8] sm:$0xff]
  %v15 = vld [vmem:[%s0 + $0x10] sm:$0xff]
  %v16 = vld [vmem:[%s0 + $0x18] sm:$0xff]
  %17 = vset.pattern.permute.xlu0 0
  %18 = vperm.xlu0 %17, %v13
  %v19 = vpop.permute.xlu0 %18
  %20 = vset.pattern.permute.xlu0 0
  %21 = vperm.xlu0 %20, %v14
  %v22 = vpop.permute.xlu0 %21
  %23 = vset.pattern.permute.xlu0 0
  %24 = vperm.xlu0 %23, %v15
  %v25 = vpop.permute.xlu0 %24
  %26 = vset.pattern.permute.xlu0 0
  %27 = vperm.xlu0 %26, %v16
  %v28 = vpop.permute.xlu0 %27
  %vm29 = vcmp.eq.s32.totalorder %v12, %v19
  %vm30 = vcmp.eq.s32.totalorder %v12, %v22
  %vm31 = vcmp.eq.s32.totalorder %v12, %v25
  %vm32 = vcmp.eq.s32.totalorder %v12, %v28
  %v33 = vsel %vm29, 1, 0
  %v34 = vsel %vm30, 1, 0
  %v35 = vsel %vm31, 1, 0
  %v36 = vsel %vm32, 1, 0
  %v37 = vcvt.s32.f32 %v33
  %v38 = vcvt.s32.f32 %v34
  %v39 = vcvt.s32.f32 %v35
  %v40 = vcvt.s32.f32 %v36
  %vm41 = vcmask 130048
  %42 = vst.msk [vmem:[%s1] sm:$0xff] %vm41, %v37
  %43 = vst.msk [vmem:[%s1 + $0x8] sm:$0xff] %vm41, %v38
  %44 = vst.msk [vmem:[%s1 + $0x10] sm:$0xff] %vm41, %v39
  %45 = vst.msk [vmem:[%s1 + $0x18] sm:$0xff] %vm41, %v40
  // Predicated region
  $region6: #{tpu_custom_call.1} parent=0 // pred_check
    _
  $region7: #{tpu_custom_call.1} parent=0 // pred_check_branch
    %47 = sbr.rel (0) target = $region9
  $region8: #{tpu_custom_call.1} parent=0 // pred_region
    _
  $region9: #{tpu_custom_call.1} parent=0 // pred_fallthru
    _
  // Predicated region
  $region10: #{tpu_custom_call.1} parent=0 // pred_check
    _
  $region11: #{tpu_custom_call.1} parent=0 // pred_check_branch
    %49 = sbr.rel (0) target = $region13
  $region12: #{tpu_custom_call.1} parent=0 // pred_region
    _
  $region13: #{tpu_custom_call.1} parent=0 // pred_fallthru
    _

</llo_original>
